<compile_context>
chip_gen: v7x
topology: tpu7x:2x2x1
jax: 0.10.0
libtpu: 0.0.40
codegen_flags: <defaults>
</compile_context>

<pallas_src>
import functools

import jax
import jax.numpy as jnp
from jax.experimental import pallas as pl
from jax.experimental.pallas import tpu as pltpu

_LANE = 128
_SUBLANE = 8
_MAX_BLOCK_B = 256  # batch tile for large batches (good for v5e/v6e/v7x)


def _round_up(n, m):
    return ((n + m - 1) // m) * m


# ----------------------------------------------------------------------------
# Pallas kernel: whole forward pass fused, weights resident in VMEM.
#   x (Bt, d_in) -> relu(x@W1+b1) -> relu(.@W2+b2) -> .@W_head+b_head
# W_head = [wv | wa | zero-pad] so the output block is 128 lanes wide.
# ----------------------------------------------------------------------------
def _dueling_kernel(x_ref, w1_ref, b1_ref, w2_ref, b2_ref, wh_ref, bh_ref,
                    o_ref):
    cdt = w1_ref.dtype  # compute dtype of the matmul operands (f32 or bf16)

    x = x_ref[...].astype(cdt)

    h1 = jnp.dot(x, w1_ref[...], preferred_element_type=jnp.float32)
    h1 = jnp.maximum(h1 + b1_ref[...], 0.0)                       # (Bt, 512) f32

    h2 = jnp.dot(h1.astype(cdt), w2_ref[...],
                 preferred_element_type=jnp.float32)
    h2 = jnp.maximum(h2 + b2_ref[...], 0.0)                       # (Bt, 512) f32

    out = jnp.dot(h2.astype(cdt), wh_ref[...],
                  preferred_element_type=jnp.float32) + bh_ref[...]
    o_ref[...] = out.astype(o_ref.dtype)                          # (Bt, 128k) f32


# ----------------------------------------------------------------------------
# One-time parameter preparation (OUTSIDE the jitted forward):
#   PyTorch layout (out, in) -> kernel layout (in, out), heads fused + padded.
# ----------------------------------------------------------------------------
def prepare_params(torch_layout_params, output_dims, compute_dtype=jnp.float32):
    w1, b1, w2, b2, wv, bv, wa, ba = torch_layout_params
    hidden = w1.shape[0]

    head_w = jnp.concatenate([wv, wa], axis=0).T                  # (hidden, 1+out)
    head_b = jnp.concatenate([bv, ba], axis=0)                    # (1+out,)
    head_pad = _round_up(1 + output_dims, _LANE)
    pad = head_pad - (1 + output_dims)
    head_w = jnp.pad(head_w, ((0, 0), (0, pad)))
    head_b = jnp.pad(head_b, ((0, pad),))

    return (
        w1.T.astype(compute_dtype),                               # (d_in, hidden)
        b1.reshape(1, hidden).astype(jnp.float32),
        w2.T.astype(compute_dtype),                               # (hidden, hidden)
        b2.reshape(1, hidden).astype(jnp.float32),
        head_w.astype(compute_dtype),                             # (hidden, head_pad)
        head_b.reshape(1, head_pad).astype(jnp.float32),
    )


# ----------------------------------------------------------------------------
# Jitted forward: no transposes / reshapes of the weights per call.
# ----------------------------------------------------------------------------
@functools.partial(jax.jit, static_argnames=("output_dims",))
def dueling_forward(x, prepped_params, *, output_dims):
    """x: (B, input_dims) f32. Returns (V, A) == ((B, 1), (B, output_dims))."""
    w1, b1, w2, b2, wh, bh = prepped_params
    B, d_in = x.shape
    hidden = w1.shape[1]
    head_pad = wh.shape[1]

    # Batch tiling: full-batch block for small B, 256-row tiles for large B.
    if B <= _MAX_BLOCK_B:
        block_b = _round_up(B, _SUBLANE)
        b_pad = block_b
    else:
        block_b = _MAX_BLOCK_B
        b_pad = _round_up(B, block_b)
    if b_pad != B:
        x = jnp.pad(x, ((0, b_pad - B), (0, 0)))

    grid = (b_pad // block_b,)

    out = pl.pallas_call(
        _dueling_kernel,
        out_shape=jax.ShapeDtypeStruct((b_pad, head_pad), jnp.float32),
        grid=grid,
        in_specs=[
            pl.BlockSpec((block_b, d_in), lambda i: (i, 0)),       # x (tiled on B)
            pl.BlockSpec((d_in, hidden), lambda i: (0, 0)),        # w1 (resident)
            pl.BlockSpec((1, hidden), lambda i: (0, 0)),           # b1
            pl.BlockSpec((hidden, hidden), lambda i: (0, 0)),      # w2 (resident)
            pl.BlockSpec((1, hidden), lambda i: (0, 0)),           # b2
            pl.BlockSpec((hidden, head_pad), lambda i: (0, 0)),    # fused head W
            pl.BlockSpec((1, head_pad), lambda i: (0, 0)),         # fused head b
        ],
        out_specs=pl.BlockSpec((block_b, head_pad), lambda i: (i, 0)),
        compiler_params=pltpu.CompilerParams(
            dimension_semantics=("parallel",)),
    )(x, w1, b1, w2, b2, wh, bh)

    V = out[:B, 0:1]
    A = out[:B, 1:1 + output_dims]
    return V, A


# ----------------------------------------------------------------------------
# Deterministic parameter init in PyTorch nn.Linear layout/scheme.
# ----------------------------------------------------------------------------
def init_params(key, input_dims, output_dims, hidden=512):
    def linear_init(k, fan_in, fan_out):
        kw, kb = jax.random.split(k)
        bound = 1.0 / jnp.sqrt(fan_in)
        w = jax.random.uniform(kw, (fan_out, fan_in), jnp.float32, -bound, bound)
        b = jax.random.uniform(kb, (fan_out,), jnp.float32, -bound, bound)
        return w, b

    k1, k2, k3, k4 = jax.random.split(key, 4)
    w1, b1 = linear_init(k1, input_dims, hidden)     # fc1
    w2, b2 = linear_init(k2, hidden, hidden)         # fc2
    wv, bv = linear_init(k3, hidden, 1)              # V_layer
    wa, ba = linear_init(k4, hidden, output_dims)    # A_layer
    return (w1, b1, w2, b2, wv, bv, wa, ba)


def reference_forward(x, torch_layout_params):
    """Pure-JAX reference mirroring the PyTorch forward."""
    w1, b1, w2, b2, wv, bv, wa, ba = torch_layout_params
    h1 = jnp.maximum(x @ w1.T + b1, 0.0)
    h2 = jnp.maximum(h1 @ w2.T + b2, 0.0)
    return h2 @ wv.T + bv, h2 @ wa.T + ba


# TODO(synk): loss / Adam optimizer / weight-file load-save from the PyTorch
# module are training/IO plumbing, not part of the forward pass; not ported.

if __name__ == "__main__":
    B, INPUT_DIMS, OUTPUT_DIMS = 8, 32, 8

    key = jax.random.PRNGKey(0)
    k_params, k_x = jax.random.split(key)
    torch_params = init_params(k_params, INPUT_DIMS, OUTPUT_DIMS)
    x = jax.random.normal(k_x, (B, INPUT_DIMS), jnp.float32)

    V_ref, A_ref = reference_forward(x, torch_params)

    # f32 path (exact semantics vs. the PyTorch module).
    prepped_f32 = prepare_params(torch_params, OUTPUT_DIMS, jnp.float32)
    V, A = dueling_forward(x, prepped_f32, output_dims=OUTPUT_DIMS)
    jax.block_until_ready((V, A))
    assert V.shape == (B, 1) and A.shape == (B, OUTPUT_DIMS)
    assert jnp.allclose(V, V_ref, atol=1e-4, rtol=1e-4)
    assert jnp.allclose(A, A_ref, atol=1e-4, rtol=1e-4)

    # bf16-weight path (halves HBM weight traffic; f32 accumulation kept).
    prepped_bf16 = prepare_params(torch_params, OUTPUT_DIMS, jnp.bfloat16)
    V16, A16 = dueling_forward(x, prepped_bf16, output_dims=OUTPUT_DIMS)
    jax.block_until_ready((V16, A16))
    assert jnp.allclose(V16, V_ref, atol=1e-1, rtol=1e-1)
    assert jnp.allclose(A16, A_ref, atol=1e-1, rtol=1e-1)

    print("KERNEL_OK")
</pallas_src>

<mosaic_0001>
module attributes {stable_mosaic.version = 11 : i64} {
  func.func @_dueling_kernel(%arg0: i32, %arg1: memref<8x32xf32, #tpu.memory_space<vmem>>, %arg2: memref<32x512xf32, #tpu.memory_space<vmem>>, %arg3: memref<1x512xf32, #tpu.memory_space<vmem>>, %arg4: memref<512x512xf32, #tpu.memory_space<vmem>>, %arg5: memref<1x512xf32, #tpu.memory_space<vmem>>, %arg6: memref<512x128xf32, #tpu.memory_space<vmem>>, %arg7: memref<1x128xf32, #tpu.memory_space<vmem>>, %arg8: memref<8x128xf32, #tpu.memory_space<vmem>>) attributes {dimension_semantics = [#tpu.dimension_semantics<parallel>], iteration_bounds = array<i64: 1>, scalar_prefetch = 0 : i64, scratch_operands = 0 : i64, tpu.core_type = #tpu.core_type<tc>, window_params = [{transform_indices = @transform_0, window_bounds = array<i64: 8, 32>}, {pipeline_mode = #tpu.pipeline_mode<synchronous>, transform_indices = @transform_1, window_bounds = array<i64: 32, 512>}, {pipeline_mode = #tpu.pipeline_mode<synchronous>, transform_indices = @transform_2, window_bounds = array<i64: 1, 512>}, {pipeline_mode = #tpu.pipeline_mode<synchronous>, transform_indices = @transform_3, window_bounds = array<i64: 512, 512>}, {pipeline_mode = #tpu.pipeline_mode<synchronous>, transform_indices = @transform_4, window_bounds = array<i64: 1, 512>}, {pipeline_mode = #tpu.pipeline_mode<synchronous>, transform_indices = @transform_5, window_bounds = array<i64: 512, 128>}, {pipeline_mode = #tpu.pipeline_mode<synchronous>, transform_indices = @transform_6, window_bounds = array<i64: 1, 128>}, {transform_indices = @transform_7, window_bounds = array<i64: 8, 128>}]} {
    %c0 = arith.constant 0 : index
    %c0_0 = arith.constant 0 : index
    %0 = vector.load %arg1[%c0, %c0_0] : memref<8x32xf32, #tpu.memory_space<vmem>>, vector<8x32xf32>
    %c0_1 = arith.constant 0 : index
    %c0_2 = arith.constant 0 : index
    %1 = vector.load %arg2[%c0_1, %c0_2] : memref<32x512xf32, #tpu.memory_space<vmem>>, vector<32x512xf32>
    %cst = arith.constant dense<0.000000e+00> : vector<8x512xf32>
    %2 = tpu.matmul %0, %1, %cst {dimension_numbers = #tpu.dot_dimension_numbers<[1], [0], [0], [1], [0, 0, 1, 1], [], []>} : vector<8x32xf32>, vector<32x512xf32>, vector<8x512xf32> -> vector<8x512xf32>
    %c0_3 = arith.constant 0 : index
    %c0_4 = arith.constant 0 : index
    %3 = vector.load %arg3[%c0_3, %c0_4] : memref<1x512xf32, #tpu.memory_space<vmem>>, vector<1x512xf32>
    %4 = vector.broadcast %3 : vector<1x512xf32> to vector<8x512xf32>
    %5 = arith.addf %2, %4 : vector<8x512xf32>
    %cst_5 = arith.constant 0.000000e+00 : f32
    %6 = vector.broadcast %cst_5 : f32 to vector<8x512xf32>
    %7 = arith.maximumf %5, %6 : vector<8x512xf32>
    %c0_6 = arith.constant 0 : index
    %c0_7 = arith.constant 0 : index
    %8 = vector.load %arg4[%c0_6, %c0_7] : memref<512x512xf32, #tpu.memory_space<vmem>>, vector<512x512xf32>
    %cst_8 = arith.constant dense<0.000000e+00> : vector<8x512xf32>
    %9 = tpu.matmul %7, %8, %cst_8 {dimension_numbers = #tpu.dot_dimension_numbers<[1], [0], [0], [1], [0, 0, 1, 1], [], []>} : vector<8x512xf32>, vector<512x512xf32>, vector<8x512xf32> -> vector<8x512xf32>
    %c0_9 = arith.constant 0 : index
    %c0_10 = arith.constant 0 : index
    %10 = vector.load %arg5[%c0_9, %c0_10] : memref<1x512xf32, #tpu.memory_space<vmem>>, vector<1x512xf32>
    %11 = vector.broadcast %10 : vector<1x512xf32> to vector<8x512xf32>
    %12 = arith.addf %9, %11 : vector<8x512xf32>
    %cst_11 = arith.constant 0.000000e+00 : f32
    %13 = vector.broadcast %cst_11 : f32 to vector<8x512xf32>
    %14 = arith.maximumf %12, %13 : vector<8x512xf32>
    %c0_12 = arith.constant 0 : index
    %c0_13 = arith.constant 0 : index
    %15 = vector.load %arg6[%c0_12, %c0_13] : memref<512x128xf32, #tpu.memory_space<vmem>>, vector<512x128xf32>
    %cst_14 = arith.constant dense<0.000000e+00> : vector<8x128xf32>
    %16 = tpu.matmul %14, %15, %cst_14 {dimension_numbers = #tpu.dot_dimension_numbers<[1], [0], [0], [1], [0, 0, 1, 1], [], []>} : vector<8x512xf32>, vector<512x128xf32>, vector<8x128xf32> -> vector<8x128xf32>
    %c0_15 = arith.constant 0 : index
    %c0_16 = arith.constant 0 : index
    %17 = vector.load %arg7[%c0_15, %c0_16] : memref<1x128xf32, #tpu.memory_space<vmem>>, vector<1x128xf32>
    %18 = vector.broadcast %17 : vector<1x128xf32> to vector<8x128xf32>
    %19 = arith.addf %16, %18 : vector<8x128xf32>
    %c0_17 = arith.constant 0 : index
    %c0_18 = arith.constant 0 : index
    %20 = vector.load %arg8[%c0_17, %c0_18] : memref<8x128xf32, #tpu.memory_space<vmem>>, vector<8x128xf32>
    tpu.vector_store %arg8[%c0_17, %c0_18], %19 {strides = array<i32>} : memref<8x128xf32, #tpu.memory_space<vmem>>, vector<8x128xf32>,
    return
  }
  func.func @transform_0(%arg0: i32) -> (i32, i32) {
    %c0_i32 = arith.constant 0 : i32
    %c0_i32_0 = arith.constant 0 : i32
    return %arg0, %c0_i32 : i32, i32
  }
  func.func @transform_1(%arg0: i32) -> (i32, i32) {
    %c0_i32 = arith.constant 0 : i32
    %c0_i32_0 = arith.constant 0 : i32
    %c0_i32_1 = arith.constant 0 : i32
    return %c0_i32, %c0_i32_0 : i32, i32
  }
  func.func @transform_2(%arg0: i32) -> (i32, i32) {
    %c0_i32 = arith.constant 0 : i32
    %c0_i32_0 = arith.constant 0 : i32
    %c0_i32_1 = arith.constant 0 : i32
    return %c0_i32, %c0_i32_0 : i32, i32
  }
  func.func @transform_3(%arg0: i32) -> (i32, i32) {
    %c0_i32 = arith.constant 0 : i32
    %c0_i32_0 = arith.constant 0 : i32
    %c0_i32_1 = arith.constant 0 : i32
    return %c0_i32, %c0_i32_0 : i32, i32
  }
  func.func @transform_4(%arg0: i32) -> (i32, i32) {
    %c0_i32 = arith.constant 0 : i32
    %c0_i32_0 = arith.constant 0 : i32
    %c0_i32_1 = arith.constant 0 : i32
    return %c0_i32, %c0_i32_0 : i32, i32
  }
  func.func @transform_5(%arg0: i32) -> (i32, i32) {
    %c0_i32 = arith.constant 0 : i32
    %c0_i32_0 = arith.constant 0 : i32
    %c0_i32_1 = arith.constant 0 : i32
    return %c0_i32, %c0_i32_0 : i32, i32
  }
  func.func @transform_6(%arg0: i32) -> (i32, i32) {
    %c0_i32 = arith.constant 0 : i32
    %c0_i32_0 = arith.constant 0 : i32
    %c0_i32_1 = arith.constant 0 : i32
    return %c0_i32, %c0_i32_0 : i32, i32
  }
  func.func @transform_7(%arg0: i32) -> (i32, i32) {
    %c0_i32 = arith.constant 0 : i32
    %c0_i32_0 = arith.constant 0 : i32
    return %arg0, %c0_i32 : i32, i32
  }
}

</mosaic_0001>

<llo_original>
// kernel: dueling_forward.1
$region0: #{dueling_forward.1}
  #allocation0 [shape = 'u32[]', space=smem, size = 0x4, offset = 0x4, fixed_abs, tag = 'smem constant byte address 0x4 - core index']
  #allocation1 [shape = 'u32[144,128]{1,0:T(1,128)}', space=vmem, size = 0x12000, scoped, tag = 'internal scratch']
  %s0 = inlined_call_operand.hbm [shape: f32[8,32], index: 0, kind: input, shape index: {}]
  %s1 = inlined_call_operand.hbm [shape: f32[32,512], index: 1, kind: input, shape index: {}]
  %s2 = inlined_call_operand.vmem [shape: f32[1,512], index: 2, kind: input, shape index: {}]
  %s3 = inlined_call_operand.hbm [shape: f32[512,512], index: 3, kind: input, shape index: {}]
  %s4 = inlined_call_operand.vmem [shape: f32[1,512], index: 4, kind: input, shape index: {}]
  %s5 = inlined_call_operand.hbm [shape: f32[512,128], index: 5, kind: input, shape index: {}]
  %s6 = inlined_call_operand.vmem [shape: f32[1,128], index: 6, kind: input, shape index: {}]
  %s7 = inlined_call_operand.vmem [shape: f32[8,128], index: 7, kind: output, shape index: {}]
  %s8 = sld [smem:[#allocation0]]
  $region54: #{dueling_forward.1} parent=0
    _
  %s10 = ssub.s32 1, %s8
  %s11 = scalar_select 0, %s10, %s8
  $region1: #{dueling_forward.1} parent=0
    #allocation2 [shape = 'u8[4096]{0}', space=vmem, size = 0x1000, scoped, tag = 'input window, operand 0, single buffered']
    #allocation3 [shape = 's32[1]{0}', space=sflag, size = 0x4, scoped, tag = 'scoped memory for dueling_forward.1']
    #allocation4 [shape = 'u8[65536]{0}', space=vmem, size = 0x10000, scoped, tag = 'input window, operand 1, single buffered']
    #allocation5 [shape = 's32[1]{0}', space=sflag, size = 0x4, scoped, tag = 'scoped memory for dueling_forward.1']
    #allocation6 [shape = 'u8[1048576]{0}', space=vmem, size = 0x100000, scoped, tag = 'input window, operand 3, single buffered']
    #allocation7 [shape = 'u8[262144]{0}', space=vmem, size = 0x40000, scoped, tag = 'input window, operand 5, single buffered']
    #allocation8 [shape = 's32[1]{0}', space=sflag, size = 0x4, scoped, tag = 'scoped memory for dueling_forward.1']
    %12 = vsyncpa [#allocation3], 0
    %13 = vsyncpa [#allocation5], 0
    %14 = vsyncpa [#allocation8], 0
    // Predicated region
    $region2: #{dueling_forward.1} parent=1 // pred_check
      _
    $region3: #{dueling_forward.1} parent=1 // pred_check_branch
      %16 = sbr.rel (0) target = $region5
    $region4: #{dueling_forward.1} parent=1 // pred_region
      %s18 = ssub.s32 128, 128
      %19 = vsyncadd [#allocation3], %s18
      %s21 = sshll.u32 [#allocation2], 4
      %s22 = int_to_ptr.vmem [resolvable:$true] %s21
      %24 = dma.hbm_to_vmem [thread:$0]  %s0, 128, %s22, [#allocation3]
    $region5: #{dueling_forward.1} parent=1 // pred_fallthru
      _
    // Predicated region
    $region6: #{dueling_forward.1} parent=1 // pred_check
      _
    $region7: #{dueling_forward.1} parent=1 // pred_check_branch
      %26 = sbr.rel (0) target = $region9
    $region8: #{dueling_forward.1} parent=1 // pred_region
      %s28 = ssub.s32 2048, 2048
      %29 = vsyncadd [#allocation5], %s28
      %s30 = sshll.u32 [#allocation4], 4
      %s31 = int_to_ptr.vmem [resolvable:$true] %s30
      %36 = dma.hbm_to_vmem [thread:$0]  %s1, 2048, %s31, [#allocation5], 512, 512, 32
    $region9: #{dueling_forward.1} parent=1 // pred_fallthru
      _
    // Predicated region
    $region10: #{dueling_forward.1} parent=1 // pred_check
      _
    $region11: #{dueling_forward.1} parent=1 // pred_check_branch
      %38 = sbr.rel (0) target = $region13
    $region12: #{dueling_forward.1} parent=1 // pred_region
      _
    $region13: #{dueling_forward.1} parent=1 // pred_fallthru
      _
    // Predicated region
    $region14: #{dueling_forward.1} parent=1 // pred_check
      _
    $region15: #{dueling_forward.1} parent=1 // pred_check_branch
      %40 = sbr.rel (0) target = $region17
    $region16: #{dueling_forward.1} parent=1 // pred_region
      %s42 = ssub.s32 32768, 32768
      %43 = vsyncadd [#allocation5], %s42
      %s44 = sshll.u32 [#allocation6], 4
      %s45 = int_to_ptr.vmem [resolvable:$true] %s44
      %50 = dma.hbm_to_vmem [thread:$0]  %s3, 32768, %s45, [#allocation5], 512, 512, 32
    $region17: #{dueling_forward.1} parent=1 // pred_fallthru
      _
    // Predicated region
    $region18: #{dueling_forward.1} parent=1 // pred_check
      _
    $region19: #{dueling_forward.1} parent=1 // pred_check_branch
      %52 = sbr.rel (0) target = $region21
    $region20: #{dueling_forward.1} parent=1 // pred_region
      _
    $region21: #{dueling_forward.1} parent=1 // pred_fallthru
      _
    // Predicated region
    $region22: #{dueling_forward.1} parent=1 // pred_check
      _
    $region23: #{dueling_forward.1} parent=1 // pred_check_branch
      %54 = sbr.rel (0) target = $region25
    $region24: #{dueling_forward.1} parent=1 // pred_region
      %s56 = ssub.s32 8192, 8192
      %57 = vsyncadd [#allocation8], %s56
      %s58 = sshll.u32 [#allocation7], 4
      %s59 = int_to_ptr.vmem [resolvable:$true] %s58
      %64 = dma.hbm_to_vmem [thread:$0]  %s5, 8192, %s59, [#allocation8], 128, 128, 8
    $region25: #{dueling_forward.1} parent=1 // pred_fallthru
      _
    // Predicated region
    $region26: #{dueling_forward.1} parent=1 // pred_check
      _
    $region27: #{dueling_forward.1} parent=1 // pred_check_branch
      %66 = sbr.rel (0) target = $region29
    $region28: #{dueling_forward.1} parent=1 // pred_region
      _
    $region29: #{dueling_forward.1} parent=1 // pred_fallthru
      _
    // Predicated region
    $region30: #{dueling_forward.1} parent=1 // pred_check
      _
    $region31: #{dueling_forward.1} parent=1 // pred_check_branch
      %68 = sbr.rel (0) target = $region33
    $region32: #{dueling_forward.1} parent=1 // pred_region
      %69 = dma.done [#allocation3], 128
    $region33: #{dueling_forward.1} parent=1 // pred_fallthru
      _
    // Predicated region
    $region34: #{dueling_forward.1} parent=1 // pred_check
      _
    $region35: #{dueling_forward.1} parent=1 // pred_check_branch
      %71 = sbr.rel (0) target = $region37
    $region36: #{dueling_forward.1} parent=1 // pred_region
      %72 = dma.done [#allocation5], 2048
    $region37: #{dueling_forward.1} parent=1 // pred_fallthru
      _
    // Predicated region
    $region38: #{dueling_forward.1} parent=1 // pred_check
      _
    $region39: #{dueling_forward.1} parent=1 // pred_check_branch
      %74 = sbr.rel (0) target = $region41
    $region40: #{dueling_forward.1} parent=1 // pred_region
      %75 = dma.done [#allocation5], 32768
    $region41: #{dueling_forward.1} parent=1 // pred_fallthru
      _
    // Predicated region
    $region42: #{dueling_forward.1} parent=1 // pred_check
      _
    $region43: #{dueling_forward.1} parent=1 // pred_check_branch
      %77 = sbr.rel (0) target = $region45
    $region44: #{dueling_forward.1} parent=1 // pred_region
      %78 = dma.done [#allocation8], 8192
    $region45: #{dueling_forward.1} parent=1 // pred_fallthru
      _
    %v79 = vld [vmem:[#allocation2] sm:$0xff]
    %v80 = vld [vmem:[#allocation4] sm:$0xff]
    %v81 = vld [vmem:[#allocation4 + $0x8] sm:$0xff]
    %v82 = vld [vmem:[#allocation4 + $0x10] sm:$0xff]
    %v83 = vld [vmem:[#allocation4 + $0x18] sm:$0xff]
    %v84 = vld [vmem:[#allocation4 + $0x20] sm:$0xff]
    %v85 = vld [vmem:[#allocation4 + $0x28] sm:$0xff]
    %v86 = vld [vmem:[#allocation4 + $0x30] sm:$0xff]
    %v87 = vld [vmem:[#allocation4 + $0x38] sm:$0xff]
    %v88 = vld [vmem:[#allocation4 + $0x40] sm:$0xff]
    %v89 = vld [vmem:[#allocation4 + $0x48] sm:$0xff]
    %v90 = vld [vmem:[#allocation4 + $0x50] sm:$0xff]
    %v91 = vld [vmem:[#allocation4 + $0x58] sm:$0xff]
    %v92 = vld [vmem:[#allocation4 + $0x60] sm:$0xff]
    %v93 = vld [vmem:[#allocation4 + $0x68] sm:$0xff]
    %v94 = vld [vmem:[#allocation4 + $0x70] sm:$0xff]
    %v95 = vld [vmem:[#allocation4 + $0x78] sm:$0xff]
    %v96 = vld [vmem:[%s2] sm:$0xf]
    %v98 = vlaneseq
    %v99 = vshrl.u32 %v98, 7
    %v100 = vsub.s32 0, %v99
    %v101 = vrot.slane %v96, %v100
    %v102 = vlaneseq
    %v103 = vshrl.u32 %v102, 7
    %v104 = vsub.s32 1, %v103
    %v105 = vrot.slane %v96, %v104
    %v106 = vlaneseq
    %v107 = vshrl.u32 %v106, 7
    %v108 = vsub.s32 2, %v107
    %v109 = vrot.slane %v96, %v108
    %v110 = vlaneseq
    %v111 = vshrl.u32 %v110, 7
    %v112 = vsub.s32 3, %v111
    %v113 = vrot.slane %v96, %v112
    %vm118 = vcmask 261120
    %v120 = vsel %vm118, %v79, 0
    %122 = vmatprep.subr.mxu0 %v81
    %123 = vmatpush1.msra.mxu0 %v80
    %124 = vmatprep.subr.mxu0 %v85
    %125 = vmatpush1.msra.mxu0 %v84
    %126 = vmatprep.subr.mxu0 %v89
    %127 = vmatpush1.msra.mxu0 %v88
    %128 = vmatprep.subr.mxu0 %v93
    %129 = vmatpush1.msra.mxu0 %v92
    %130 = vmatprep.subr.mxu0 0.0
    %131 = vmatpush1.msra.mxu0 0.0
    %132 = vmatprep.subr.mxu0 0.0
    %133 = vmatpush1.msra.mxu0 0.0
    %134 = vmatprep.subr.mxu0 0.0
    %135 = vmatpush1.msra.mxu0 0.0
    %136 = vmatprep.subr.mxu0 0.0
    %137 = vmatpush1.msra.mxu0 0.0
    %138 = vmatprep.subr.mxu0 0.0
    %139 = vmatpush1.msra.mxu0 0.0
    %140 = vmatprep.subr.mxu0 0.0
    %141 = vmatpush1.msra.mxu0 0.0
    %142 = vmatprep.subr.mxu0 0.0
    %143 = vmatpush1.msra.mxu0 0.0
    %144 = vmatprep.subr.mxu0 0.0
    %145 = vmatpush1.msra.mxu0 0.0
    %146 = vmatprep.subr.mxu0 0.0
    %147 = vmatpush1.msra.mxu0 0.0
    %148 = vmatprep.subr.mxu0 0.0
    %149 = vmatpush1.msra.mxu0 0.0
    %150 = vmatprep.subr.mxu0 0.0
    %151 = vmatpush1.msra.mxu0 0.0
    %152 = vmatprep.subr.mxu0 0.0
    %153 = vmatpush1.msra.mxu0 0.0
    %154 = vmatprep.subr.mxu0 0.0
    %155 = vmatpush1.msra.mxu0 0.0
    %156 = vmatprep.subr.mxu0 0.0
    %157 = vmatpush1.msra.mxu0 0.0
    %158 = vmatprep.subr.mxu0 0.0
    %159 = vmatpush1.msra.mxu0 0.0
    %160 = vmatprep.subr.mxu0 0.0
    %161 = vmatpush1.msra.mxu0 0.0
    %162 = vmatprep.subr.mxu0 0.0
    %163 = vmatpush1.msra.mxu0 0.0
    %164 = vmatprep.subr.mxu0 0.0
    %165 = vmatpush1.msra.mxu0 0.0
    %166 = vmatprep.subr.mxu0 0.0
    %167 = vmatpush1.msra.mxu0 0.0
    %168 = vmatprep.subr.mxu0 0.0
    %169 = vmatpush1.msra.mxu0 0.0
    %170 = vmatprep.subr.mxu0 0.0
    %171 = vmatpush1.msra.mxu0 0.0
    %172 = vmatprep.subr.mxu0 0.0
    %173 = vmatpush1.msra.mxu0 0.0
    %174 = vmatprep.subr.mxu0 0.0
    %175 = vmatpush1.msra.mxu0 0.0
    %176 = vmatprep.subr.mxu0 0.0
    %177 = vmatpush1.msra.mxu0 0.0
    %178 = vmatprep.subr.mxu0 0.0
    %179 = vmatpush1.msra.mxu0 0.0
    %180 = vmatprep.subr.mxu0 0.0
    %181 = vmatpush1.msra.mxu0 0.0
    %182 = vmatprep.subr.mxu0 0.0
    %183 = vmatpush1.msra.mxu0 0.0
    %184 = vmatprep.subr.mxu0 0.0
    %185 = vmatpush1.msra.mxu0 0.0
    %186 = vmatprep.mubr.f32.mxu0 0.0
    %187 = vmatmul.mubr.f32.gmra.mrb[0].mxu0 %v120
    %v188 = vpop.f32.mrb[0].mxu0
    %v189 = vadd.f32 %v101, %v188
    %v190 = vpop.f32.mrb[0].mxu0
    %v191 = vadd.f32 %v105, %v190
    %192 = vdwg.mxu0
    %193 = vmatprep.subr.mxu0 %v83
    %194 = vmatpush1.msra.mxu0 %v82
    %195 = vmatprep.subr.mxu0 %v87
    %196 = vmatpush1.msra.mxu0 %v86
    %197 = vmatprep.subr.mxu0 %v91
    %198 = vmatpush1.msra.mxu0 %v90
    %199 = vmatprep.subr.mxu0 %v95
    %200 = vmatpush1.msra.mxu0 %v94
    %201 = vmatprep.subr.mxu0 0.0
    %202 = vmatpush1.msra.mxu0 0.0
    %203 = vmatprep.subr.mxu0 0.0
    %204 = vmatpush1.msra.mxu0 0.0
    %205 = vmatprep.subr.mxu0 0.0
    %206 = vmatpush1.msra.mxu0 0.0
    %207 = vmatprep.subr.mxu0 0.0
    %208 = vmatpush1.msra.mxu0 0.0
    %209 = vmatprep.subr.mxu0 0.0
    %210 = vmatpush1.msra.mxu0 0.0
    %211 = vmatprep.subr.mxu0 0.0
    %212 = vmatpush1.msra.mxu0 0.0
    %213 = vmatprep.subr.mxu0 0.0
    %214 = vmatpush1.msra.mxu0 0.0
    %215 = vmatprep.subr.mxu0 0.0
    %216 = vmatpush1.msra.mxu0 0.0
    %217 = vmatprep.subr.mxu0 0.0
    %218 = vmatpush1.msra.mxu0 0.0
    %219 = vmatprep.subr.mxu0 0.0
    %220 = vmatpush1.msra.mxu0 0.0
    %221 = vmatprep.subr.mxu0 0.0
    %222 = vmatpush1.msra.mxu0 0.0
    %223 = vmatprep.subr.mxu0 0.0
    %224 = vmatpush1.msra.mxu0 0.0
    %225 = vmatprep.subr.mxu0 0.0
    %226 = vmatpush1.msra.mxu0 0.0
    %227 = vmatprep.subr.mxu0 0.0
    %228 = vmatpush1.msra.mxu0 0.0
    %229 = vmatprep.subr.mxu0 0.0
    %230 = vmatpush1.msra.mxu0 0.0
    %231 = vmatprep.subr.mxu0 0.0
    %232 = vmatpush1.msra.mxu0 0.0
    %233 = vmatprep.subr.mxu0 0.0
    %234 = vmatpush1.msra.mxu0 0.0
    %235 = vmatprep.subr.mxu0 0.0
    %236 = vmatpush1.msra.mxu0 0.0
    %237 = vmatprep.subr.mxu0 0.0
    %238 = vmatpush1.msra.mxu0 0.0
    %239 = vmatprep.subr.mxu0 0.0
    %240 = vmatpush1.msra.mxu0 0.0
    %241 = vmatprep.subr.mxu0 0.0
    %242 = vmatpush1.msra.mxu0 0.0
    %243 = vmatprep.subr.mxu0 0.0
    %244 = vmatpush1.msra.mxu0 0.0
    %245 = vmatprep.subr.mxu0 0.0
    %246 = vmatpush1.msra.mxu0 0.0
    %247 = vmatprep.subr.mxu0 0.0
    %248 = vmatpush1.msra.mxu0 0.0
    %249 = vmatprep.subr.mxu0 0.0
    %250 = vmatpush1.msra.mxu0 0.0
    %251 = vmatprep.subr.mxu0 0.0
    %252 = vmatpush1.msra.mxu0 0.0
    %253 = vmatprep.subr.mxu0 0.0
    %254 = vmatpush1.msra.mxu0 0.0
    %255 = vmatprep.subr.mxu0 0.0
    %256 = vmatpush1.msra.mxu0 0.0
    %257 = vmatprep.mubr.f32.mxu0 0.0
    %258 = vmatmul.mubr.f32.gmra.mrb[0].mxu0 %v120
    %v259 = vpop.f32.mrb[0].mxu0
    %v260 = vadd.f32 %v109, %v259
    %v261 = vpop.f32.mrb[0].mxu0
    %v262 = vadd.f32 %v113, %v261
    %263 = vdwg.mxu0
    %v264 = vmax.f32 %v189, 0.0
    %v265 = vmax.f32 %v191, 0.0
    %v266 = vmax.f32 %v260, 0.0
    %v267 = vmax.f32 %v262, 0.0
    %v268 = vld [vmem:[#allocation6] sm:$0xff]
    %v269 = vld [vmem:[#allocation6 + $0x8] sm:$0xff]
    %v270 = vld [vmem:[#allocation6 + $0x10] sm:$0xff]
    %v271 = vld [vmem:[#allocation6 + $0x18] sm:$0xff]
    %v272 = vld [vmem:[#allocation6 + $0x20] sm:$0xff]
    %v273 = vld [vmem:[#allocation6 + $0x28] sm:$0xff]
    %v274 = vld [vmem:[#allocation6 + $0x30] sm:$0xff]
    %v275 = vld [vmem:[#allocation6 + $0x38] sm:$0xff]
    %v276 = vld [vmem:[#allocation6 + $0x40] sm:$0xff]
    %v277 = vld [vmem:[#allocation6 + $0x48] sm:$0xff]
    %v278 = vld [vmem:[#allocation6 + $0x50] sm:$0xff]
    %v279 = vld [vmem:[#allocation6 + $0x58] sm:$0xff]
    %v280 = vld [vmem:[#allocation6 + $0x60] sm:$0xff]
    %v281 = vld [vmem:[#allocation6 + $0x68] sm:$0xff]
    %v282 = vld [vmem:[#allocation6 + $0x70] sm:$0xff]
    %v283 = vld [vmem:[#allocation6 + $0x78] sm:$0xff]
    %v284 = vld [vmem:[#allocation6 + $0x80] sm:$0xff]
    %v285 = vld [vmem:[#allocation6 + $0x88] sm:$0xff]
    %v286 = vld [vmem:[#allocation6 + $0x90] sm:$0xff]
    %v287 = vld [vmem:[#allocation6 + $0x98] sm:$0xff]
    %v288 = vld [vmem:[#allocation6 + $0xa0] sm:$0xff]
    %v289 = vld [vmem:[#allocation6 + $0xa8] sm:$0xff]
    %v290 = vld [vmem:[#allocation6 + $0xb0] sm:$0xff]
    %v291 = vld [vmem:[#allocation6 + $0xb8] sm:$0xff]
    %v292 = vld [vmem:[#allocation6 + $0xc0] sm:$0xff]
    %v293 = vld [vmem:[#allocation6 + $0xc8] sm:$0xff]
    %v294 = vld [vmem:[#allocation6 + $0xd0] sm:$0xff]
    %v295 = vld [vmem:[#allocation6 + $0xd8] sm:$0xff]
    %v296 = vld [vmem:[#allocation6 + $0xe0] sm:$0xff]
    %v297 = vld [vmem:[#allocation6 + $0xe8] sm:$0xff]
    %v298 = vld [vmem:[#allocation6 + $0xf0] sm:$0xff]
    %v299 = vld [vmem:[#allocation6 + $0xf8] sm:$0xff]
    %v300 = vld [vmem:[#allocation6 + $0x100] sm:$0xff]
    %v301 = vld [vmem:[#allocation6 + $0x108] sm:$0xff]
    %v302 = vld [vmem:[#allocation6 + $0x110] sm:$0xff]
    %v303 = vld [vmem:[#allocation6 + $0x118] sm:$0xff]
    %v304 = vld [vmem:[#allocation6 + $0x120] sm:$0xff]
    %v305 = vld [vmem:[#allocation6 + $0x128] sm:$0xff]
    %v306 = vld [vmem:[#allocation6 + $0x130] sm:$0xff]
    %v307 = vld [vmem:[#allocation6 + $0x138] sm:$0xff]
    %v308 = vld [vmem:[#allocation6 + $0x140] sm:$0xff]
    %v309 = vld [vmem:[#allocation6 + $0x148] sm:$0xff]
    %v310 = vld [vmem:[#allocation6 + $0x150] sm:$0xff]
    %v311 = vld [vmem:[#allocation6 + $0x158] sm:$0xff]
    %v312 = vld [vmem:[#allocation6 + $0x160] sm:$0xff]
    %v313 = vld [vmem:[#allocation6 + $0x168] sm:$0xff]
    %v314 = vld [vmem:[#allocation6 + $0x170] sm:$0xff]
    %v315 = vld [vmem:[#allocation6 + $0x178] sm:$0xff]
    %v316 = vld [vmem:[#allocation6 + $0x180] sm:$0xff]
    %v317 = vld [vmem:[#allocation6 + $0x188] sm:$0xff]
    %v318 = vld [vmem:[#allocation6 + $0x190] sm:$0xff]
    %v319 = vld [vmem:[#allocation6 + $0x198] sm:$0xff]
    %v320 = vld [vmem:[#allocation6 + $0x1a0] sm:$0xff]
    %v321 = vld [vmem:[#allocation6 + $0x1a8] sm:$0xff]
    %v322 = vld [vmem:[#allocation6 + $0x1b0] sm:$0xff]
    %v323 = vld [vmem:[#allocation6 + $0x1b8] sm:$0xff]
    %v324 = vld [vmem:[#allocation6 + $0x1c0] sm:$0xff]
    %v325 = vld [vmem:[#allocation6 + $0x1c8] sm:$0xff]
    %v326 = vld [vmem:[#allocation6 + $0x1d0] sm:$0xff]
    %v327 = vld [vmem:[#allocation6 + $0x1d8] sm:$0xff]
    %v328 = vld [vmem:[#allocation6 + $0x1e0] sm:$0xff]
    %v329 = vld [vmem:[#allocation6 + $0x1e8] sm:$0xff]
    %v330 = vld [vmem:[#allocation6 + $0x1f0] sm:$0xff]
    %v331 = vld [vmem:[#allocation6 + $0x1f8] sm:$0xff]
    %v332 = vld [vmem:[#allocation6 + $0x200] sm:$0xff]
    %v333 = vld [vmem:[#allocation6 + $0x208] sm:$0xff]
    %v334 = vld [vmem:[#allocation6 + $0x210] sm:$0xff]
    %v335 = vld [vmem:[#allocation6 + $0x218] sm:$0xff]
    %v336 = vld [vmem:[#allocation6 + $0x220] sm:$0xff]
    %v337 = vld [vmem:[#allocation6 + $0x228] sm:$0xff]
    %v338 = vld [vmem:[#allocation6 + $0x230] sm:$0xff]
    %v339 = vld [vmem:[#allocation6 + $0x238] sm:$0xff]
    %v340 = vld [vmem:[#allocation6 + $0x240] sm:$0xff]
    %v341 = vld [vmem:[#allocation6 + $0x248] sm:$0xff]
    %v342 = vld [vmem:[#allocation6 + $0x250] sm:$0xff]
    %v343 = vld [vmem:[#allocation6 + $0x258] sm:$0xff]
    %v344 = vld [vmem:[#allocation6 + $0x260] sm:$0xff]
    %v345 = vld [vmem:[#allocation6 + $0x268] sm:$0xff]
    %v346 = vld [vmem:[#allocation6 + $0x270] sm:$0xff]
    %v347 = vld [vmem:[#allocation6 + $0x278] sm:$0xff]
    %v348 = vld [vmem:[#allocation6 + $0x280] sm:$0xff]
    %v349 = vld [vmem:[#allocation6 + $0x288] sm:$0xff]
    %v350 = vld [vmem:[#allocation6 + $0x290] sm:$0xff]
    %v351 = vld [vmem:[#allocation6 + $0x298] sm:$0xff]
    %v352 = vld [vmem:[#allocation6 + $0x2a0] sm:$0xff]
    %v353 = vld [vmem:[#allocation6 + $0x2a8] sm:$0xff]
    %v354 = vld [vmem:[#allocation6 + $0x2b0] sm:$0xff]
    %v355 = vld [vmem:[#allocation6 + $0x2b8] sm:$0xff]
    %v356 = vld [vmem:[#allocation6 + $0x2c0] sm:$0xff]
    %v357 = vld [vmem:[#allocation6 + $0x2c8] sm:$0xff]
    %v358 = vld [vmem:[#allocation6 + $0x2d0] sm:$0xff]
    %v359 = vld [vmem:[#allocation6 + $0x2d8] sm:$0xff]
    %v360 = vld [vmem:[#allocation6 + $0x2e0] sm:$0xff]
    %v361 = vld [vmem:[#allocation6 + $0x2e8] sm:$0xff]
    %v362 = vld [vmem:[#allocation6 + $0x2f0] sm:$0xff]
    %v363 = vld [vmem:[#allocation6 + $0x2f8] sm:$0xff]
    %v364 = vld [vmem:[#allocation6 + $0x300] sm:$0xff]
    %v365 = vld [vmem:[#allocation6 + $0x308] sm:$0xff]
    %v366 = vld [vmem:[#allocation6 + $0x310] sm:$0xff]
    %v367 = vld [vmem:[#allocation6 + $0x318] sm:$0xff]
    %v368 = vld [vmem:[#allocation6 + $0x320] sm:$0xff]
    %v369 = vld [vmem:[#allocation6 + $0x328] sm:$0xff]
    %v370 = vld [vmem:[#allocation6 + $0x330] sm:$0xff]
    %v371 = vld [vmem:[#allocation6 + $0x338] sm:$0xff]
    %v372 = vld [vmem:[#allocation6 + $0x340] sm:$0xff]
    %v373 = vld [vmem:[#allocation6 + $0x348] sm:$0xff]
    %v374 = vld [vmem:[#allocation6 + $0x350] sm:$0xff]
    %v375 = vld [vmem:[#allocation6 + $0x358] sm:$0xff]
    %v376 = vld [vmem:[#allocation6 + $0x360] sm:$0xff]
    %v377 = vld [vmem:[#allocation6 + $0x368] sm:$0xff]
    %v378 = vld [vmem:[#allocation6 + $0x370] sm:$0xff]
    %v379 = vld [vmem:[#allocation6 + $0x378] sm:$0xff]
    %v380 = vld [vmem:[#allocation6 + $0x380] sm:$0xff]
    %v381 = vld [vmem:[#allocation6 + $0x388] sm:$0xff]
    %v382 = vld [vmem:[#allocation6 + $0x390] sm:$0xff]
    %v383 = vld [vmem:[#allocation6 + $0x398] sm:$0xff]
    %v384 = vld [vmem:[#allocation6 + $0x3a0] sm:$0xff]
    %v385 = vld [vmem:[#allocation6 + $0x3a8] sm:$0xff]
    %v386 = vld [vmem:[#allocation6 + $0x3b0] sm:$0xff]
    %v387 = vld [vmem:[#allocation6 + $0x3b8] sm:$0xff]
    %v388 = vld [vmem:[#allocation6 + $0x3c0] sm:$0xff]
    %v389 = vld [vmem:[#allocation6 + $0x3c8] sm:$0xff]
    %v390 = vld [vmem:[#allocation6 + $0x3d0] sm:$0xff]
    %v391 = vld [vmem:[#allocation6 + $0x3d8] sm:$0xff]
    %v392 = vld [vmem:[#allocation6 + $0x3e0] sm:$0xff]
    %v393 = vld [vmem:[#allocation6 + $0x3e8] sm:$0xff]
    %v394 = vld [vmem:[#allocation6 + $0x3f0] sm:$0xff]
    %v395 = vld [vmem:[#allocation6 + $0x3f8] sm:$0xff]
    %v396 = vld [vmem:[#allocation6 + $0x400] sm:$0xff]
    %v397 = vld [vmem:[#allocation6 + $0x408] sm:$0xff]
    %v398 = vld [vmem:[#allocation6 + $0x410] sm:$0xff]
    %v399 = vld [vmem:[#allocation6 + $0x418] sm:$0xff]
    %v400 = vld [vmem:[#allocation6 + $0x420] sm:$0xff]
    %v401 = vld [vmem:[#allocation6 + $0x428] sm:$0xff]
    %v402 = vld [vmem:[#allocation6 + $0x430] sm:$0xff]
    %v403 = vld [vmem:[#allocation6 + $0x438] sm:$0xff]
    %v404 = vld [vmem:[#allocation6 + $0x440] sm:$0xff]
    %v405 = vld [vmem:[#allocation6 + $0x448] sm:$0xff]
    %v406 = vld [vmem:[#allocation6 + $0x450] sm:$0xff]
    %v407 = vld [vmem:[#allocation6 + $0x458] sm:$0xff]
    %v408 = vld [vmem:[#allocation6 + $0x460] sm:$0xff]
    %v409 = vld [vmem:[#allocation6 + $0x468] sm:$0xff]
    %v410 = vld [vmem:[#allocation6 + $0x470] sm:$0xff]
    %v411 = vld [vmem:[#allocation6 + $0x478] sm:$0xff]
    %v412 = vld [vmem:[#allocation6 + $0x480] sm:$0xff]
    %v413 = vld [vmem:[#allocation6 + $0x488] sm:$0xff]
    %v414 = vld [vmem:[#allocation6 + $0x490] sm:$0xff]
    %v415 = vld [vmem:[#allocation6 + $0x498] sm:$0xff]
    %v416 = vld [vmem:[#allocation6 + $0x4a0] sm:$0xff]
    %v417 = vld [vmem:[#allocation6 + $0x4a8] sm:$0xff]
    %v418 = vld [vmem:[#allocation6 + $0x4b0] sm:$0xff]
    %v419 = vld [vmem:[#allocation6 + $0x4b8] sm:$0xff]
    %v420 = vld [vmem:[#allocation6 + $0x4c0] sm:$0xff]
    %v421 = vld [vmem:[#allocation6 + $0x4c8] sm:$0xff]
    %v422 = vld [vmem:[#allocation6 + $0x4d0] sm:$0xff]
    %v423 = vld [vmem:[#allocation6 + $0x4d8] sm:$0xff]
    %v424 = vld [vmem:[#allocation6 + $0x4e0] sm:$0xff]
    %v425 = vld [vmem:[#allocation6 + $0x4e8] sm:$0xff]
    %v426 = vld [vmem:[#allocation6 + $0x4f0] sm:$0xff]
    %v427 = vld [vmem:[#allocation6 + $0x4f8] sm:$0xff]
    %v428 = vld [vmem:[#allocation6 + $0x500] sm:$0xff]
    %v429 = vld [vmem:[#allocation6 + $0x508] sm:$0xff]
    %v430 = vld [vmem:[#allocation6 + $0x510] sm:$0xff]
    %v431 = vld [vmem:[#allocation6 + $0x518] sm:$0xff]
    %v432 = vld [vmem:[#allocation6 + $0x520] sm:$0xff]
    %v433 = vld [vmem:[#allocation6 + $0x528] sm:$0xff]
    %v434 = vld [vmem:[#allocation6 + $0x530] sm:$0xff]
    %v435 = vld [vmem:[#allocation6 + $0x538] sm:$0xff]
    %v436 = vld [vmem:[#allocation6 + $0x540] sm:$0xff]
    %v437 = vld [vmem:[#allocation6 + $0x548] sm:$0xff]
    %v438 = vld [vmem:[#allocation6 + $0x550] sm:$0xff]
    %v439 = vld [vmem:[#allocation6 + $0x558] sm:$0xff]
    %v440 = vld [vmem:[#allocation6 + $0x560] sm:$0xff]
    %v441 = vld [vmem:[#allocation6 + $0x568] sm:$0xff]
    %v442 = vld [vmem:[#allocation6 + $0x570] sm:$0xff]
    %v443 = vld [vmem:[#allocation6 + $0x578] sm:$0xff]
    %v444 = vld [vmem:[#allocation6 + $0x580] sm:$0xff]
    %v445 = vld [vmem:[#allocation6 + $0x588] sm:$0xff]
    %v446 = vld [vmem:[#allocation6 + $0x590] sm:$0xff]
    %v447 = vld [vmem:[#allocation6 + $0x598] sm:$0xff]
    %v448 = vld [vmem:[#allocation6 + $0x5a0] sm:$0xff]
    %v449 = vld [vmem:[#allocation6 + $0x5a8] sm:$0xff]
    %v450 = vld [vmem:[#allocation6 + $0x5b0] sm:$0xff]
    %v451 = vld [vmem:[#allocation6 + $0x5b8] sm:$0xff]
    %v452 = vld [vmem:[#allocation6 + $0x5c0] sm:$0xff]
    %v453 = vld [vmem:[#allocation6 + $0x5c8] sm:$0xff]
    %v454 = vld [vmem:[#allocation6 + $0x5d0] sm:$0xff]
    %v455 = vld [vmem:[#allocation6 + $0x5d8] sm:$0xff]
    %v456 = vld [vmem:[#allocation6 + $0x5e0] sm:$0xff]
    %v457 = vld [vmem:[#allocation6 + $0x5e8] sm:$0xff]
    %v458 = vld [vmem:[#allocation6 + $0x5f0] sm:$0xff]
    %v459 = vld [vmem:[#allocation6 + $0x5f8] sm:$0xff]
    %v460 = vld [vmem:[#allocation6 + $0x600] sm:$0xff]
    %v461 = vld [vmem:[#allocation6 + $0x608] sm:$0xff]
    %v462 = vld [vmem:[#allocation6 + $0x610] sm:$0xff]
    %v463 = vld [vmem:[#allocation6 + $0x618] sm:$0xff]
    %v464 = vld [vmem:[#allocation6 + $0x620] sm:$0xff]
    %v465 = vld [vmem:[#allocation6 + $0x628] sm:$0xff]
    %v466 = vld [vmem:[#allocation6 + $0x630] sm:$0xff]
    %v467 = vld [vmem:[#allocation6 + $0x638] sm:$0xff]
    %v468 = vld [vmem:[#allocation6 + $0x640] sm:$0xff]
    %v469 = vld [vmem:[#allocation6 + $0x648] sm:$0xff]
    %v470 = vld [vmem:[#allocation6 + $0x650] sm:$0xff]
    %v471 = vld [vmem:[#allocation6 + $0x658] sm:$0xff]
    %v472 = vld [vmem:[#allocation6 + $0x660] sm:$0xff]
    %v473 = vld [vmem:[#allocation6 + $0x668] sm:$0xff]
    %v474 = vld [vmem:[#allocation6 + $0x670] sm:$0xff]
    %v475 = vld [vmem:[#allocation6 + $0x678] sm:$0xff]
    %v476 = vld [vmem:[#allocation6 + $0x680] sm:$0xff]
    %v477 = vld [vmem:[#allocation6 + $0x688] sm:$0xff]
    %v478 = vld [vmem:[#allocation6 + $0x690] sm:$0xff]
    %v479 = vld [vmem:[#allocation6 + $0x698] sm:$0xff]
    %v480 = vld [vmem:[#allocation6 + $0x6a0] sm:$0xff]
    %v481 = vld [vmem:[#allocation6 + $0x6a8] sm:$0xff]
    %v482 = vld [vmem:[#allocation6 + $0x6b0] sm:$0xff]
    %v483 = vld [vmem:[#allocation6 + $0x6b8] sm:$0xff]
    %v484 = vld [vmem:[#allocation6 + $0x6c0] sm:$0xff]
    %v485 = vld [vmem:[#allocation6 + $0x6c8] sm:$0xff]
    %v486 = vld [vmem:[#allocation6 + $0x6d0] sm:$0xff]
    %v487 = vld [vmem:[#allocation6 + $0x6d8] sm:$0xff]
    %v488 = vld [vmem:[#allocation6 + $0x6e0] sm:$0xff]
    %v489 = vld [vmem:[#allocation6 + $0x6e8] sm:$0xff]
    %v490 = vld [vmem:[#allocation6 + $0x6f0] sm:$0xff]
    %v491 = vld [vmem:[#allocation6 + $0x6f8] sm:$0xff]
    %v492 = vld [vmem:[#allocation6 + $0x700] sm:$0xff]
    %v493 = vld [vmem:[#allocation6 + $0x708] sm:$0xff]
    %v494 = vld [vmem:[#allocation6 + $0x710] sm:$0xff]
    %v495 = vld [vmem:[#allocation6 + $0x718] sm:$0xff]
    %v496 = vld [vmem:[#allocation6 + $0x720] sm:$0xff]
    %v497 = vld [vmem:[#allocation6 + $0x728] sm:$0xff]
    %v498 = vld [vmem:[#allocation6 + $0x730] sm:$0xff]
    %v499 = vld [vmem:[#allocation6 + $0x738] sm:$0xff]
    %v500 = vld [vmem:[#allocation6 + $0x740] sm:$0xff]
    %v501 = vld [vmem:[#allocation6 + $0x748] sm:$0xff]
    %v502 = vld [vmem:[#allocation6 + $0x750] sm:$0xff]
    %v503 = vld [vmem:[#allocation6 + $0x758] sm:$0xff]
    %v504 = vld [vmem:[#allocation6 + $0x760] sm:$0xff]
    %v505 = vld [vmem:[#allocation6 + $0x768] sm:$0xff]
    %v506 = vld [vmem:[#allocation6 + $0x770] sm:$0xff]
    %v507 = vld [vmem:[#allocation6 + $0x778] sm:$0xff]
    %v508 = vld [vmem:[#allocation6 + $0x780] sm:$0xff]
    %v509 = vld [vmem:[#allocation6 + $0x788] sm:$0xff]
    %v510 = vld [vmem:[#allocation6 + $0x790] sm:$0xff]
    %v511 = vld [vmem:[#allocation6 + $0x798] sm:$0xff]
    %v512 = vld [vmem:[#allocation6 + $0x7a0] sm:$0xff]
    %v513 = vld [vmem:[#allocation6 + $0x7a8] sm:$0xff]
    %v514 = vld [vmem:[#allocation6 + $0x7b0] sm:$0xff]
    %v515 = vld [vmem:[#allocation6 + $0x7b8] sm:$0xff]
    %v516 = vld [vmem:[#allocation6 + $0x7c0] sm:$0xff]
    %v517 = vld [vmem:[#allocation6 + $0x7c8] sm:$0xff]
    %v518 = vld [vmem:[#allocation6 + $0x7d0] sm:$0xff]
    %v519 = vld [vmem:[#allocation6 + $0x7d8] sm:$0xff]
    %v520 = vld [vmem:[#allocation6 + $0x7e0] sm:$0xff]
    %v521 = vld [vmem:[#allocation6 + $0x7e8] sm:$0xff]
    %v522 = vld [vmem:[#allocation6 + $0x7f0] sm:$0xff]
    %v523 = vld [vmem:[#allocation6 + $0x7f8] sm:$0xff]
    %v524 = vld [vmem:[%s4] sm:$0xf]
    %v526 = vlaneseq
    %v527 = vshrl.u32 %v526, 7
    %v528 = vsub.s32 0, %v527
    %v529 = vrot.slane %v524, %v528
    %v530 = vlaneseq
    %v531 = vshrl.u32 %v530, 7
    %v532 = vsub.s32 1, %v531
    %v533 = vrot.slane %v524, %v532
    %v534 = vlaneseq
    %v535 = vshrl.u32 %v534, 7
    %v536 = vsub.s32 2, %v535
    %v537 = vrot.slane %v524, %v536
    %v538 = vlaneseq
    %v539 = vshrl.u32 %v538, 7
    %v540 = vsub.s32 3, %v539
    %v541 = vrot.slane %v524, %v540
    %546 = vmatprep.subr.mxu0 %v269
    %547 = vmatpush1.msra.mxu0 %v268
    %548 = vmatprep.subr.mxu0 %v273
    %549 = vmatpush1.msra.mxu0 %v272
    %550 = vmatprep.subr.mxu0 %v277
    %551 = vmatpush1.msra.mxu0 %v276
    %552 = vmatprep.subr.mxu0 %v281
    %553 = vmatpush1.msra.mxu0 %v280
    %554 = vmatprep.subr.mxu0 %v285
    %555 = vmatpush1.msra.mxu0 %v284
    %556 = vmatprep.subr.mxu0 %v289
    %557 = vmatpush1.msra.mxu0 %v288
    %558 = vmatprep.subr.mxu0 %v293
    %559 = vmatpush1.msra.mxu0 %v292
    %560 = vmatprep.subr.mxu0 %v297
    %561 = vmatpush1.msra.mxu0 %v296
    %562 = vmatprep.subr.mxu0 %v301
    %563 = vmatpush1.msra.mxu0 %v300
    %564 = vmatprep.subr.mxu0 %v305
    %565 = vmatpush1.msra.mxu0 %v304
    %566 = vmatprep.subr.mxu0 %v309
    %567 = vmatpush1.msra.mxu0 %v308
    %568 = vmatprep.subr.mxu0 %v313
    %569 = vmatpush1.msra.mxu0 %v312
    %570 = vmatprep.subr.mxu0 %v317
    %571 = vmatpush1.msra.mxu0 %v316
    %572 = vmatprep.subr.mxu0 %v321
    %573 = vmatpush1.msra.mxu0 %v320
    %574 = vmatprep.subr.mxu0 %v325
    %575 = vmatpush1.msra.mxu0 %v324
    %576 = vmatprep.subr.mxu0 %v329
    %577 = vmatpush1.msra.mxu0 %v328
    %578 = vmatprep.subr.mxu0 %v333
    %579 = vmatpush1.msra.mxu0 %v332
    %580 = vmatprep.subr.mxu0 %v337
    %581 = vmatpush1.msra.mxu0 %v336
    %582 = vmatprep.subr.mxu0 %v341
    %583 = vmatpush1.msra.mxu0 %v340
    %584 = vmatprep.subr.mxu0 %v345
    %585 = vmatpush1.msra.mxu0 %v344
    %586 = vmatprep.subr.mxu0 %v349
    %587 = vmatpush1.msra.mxu0 %v348
    %588 = vmatprep.subr.mxu0 %v353
    %589 = vmatpush1.msra.mxu0 %v352
    %590 = vmatprep.subr.mxu0 %v357
    %591 = vmatpush1.msra.mxu0 %v356
    %592 = vmatprep.subr.mxu0 %v361
    %593 = vmatpush1.msra.mxu0 %v360
    %594 = vmatprep.subr.mxu0 %v365
    %595 = vmatpush1.msra.mxu0 %v364
    %596 = vmatprep.subr.mxu0 %v369
    %597 = vmatpush1.msra.mxu0 %v368
    %598 = vmatprep.subr.mxu0 %v373
    %599 = vmatpush1.msra.mxu0 %v372
    %600 = vmatprep.subr.mxu0 %v377
    %601 = vmatpush1.msra.mxu0 %v376
    %602 = vmatprep.subr.mxu0 %v381
    %603 = vmatpush1.msra.mxu0 %v380
    %604 = vmatprep.subr.mxu0 %v385
    %605 = vmatpush1.msra.mxu0 %v384
    %606 = vmatprep.subr.mxu0 %v389
    %607 = vmatpush1.msra.mxu0 %v388
    %608 = vmatprep.subr.mxu0 %v393
    %609 = vmatpush1.msra.mxu0 %v392
    %610 = vmatprep.mubr.f32.mxu0 %v265
    %611 = vmatmul.mubr.f32.gmra.mrb[0].mxu0 %v264
    %v612 = vpop.f32.mrb[0].mxu0
    %v613 = vadd.f32 %v529, %v612
    %v614 = vpop.f32.mrb[0].mxu0
    %v615 = vadd.f32 %v533, %v614
    %616 = vdwg.mxu0
    %617 = vmatprep.subr.mxu0 %v397
    %618 = vmatpush1.msra.mxu0 %v396
    %619 = vmatprep.subr.mxu0 %v401
    %620 = vmatpush1.msra.mxu0 %v400
    %621 = vmatprep.subr.mxu0 %v405
    %622 = vmatpush1.msra.mxu0 %v404
    %623 = vmatprep.subr.mxu0 %v409
    %624 = vmatpush1.msra.mxu0 %v408
    %625 = vmatprep.subr.mxu0 %v413
    %626 = vmatpush1.msra.mxu0 %v412
    %627 = vmatprep.subr.mxu0 %v417
    %628 = vmatpush1.msra.mxu0 %v416
    %629 = vmatprep.subr.mxu0 %v421
    %630 = vmatpush1.msra.mxu0 %v420
    %631 = vmatprep.subr.mxu0 %v425
    %632 = vmatpush1.msra.mxu0 %v424
    %633 = vmatprep.subr.mxu0 %v429
    %634 = vmatpush1.msra.mxu0 %v428
    %635 = vmatprep.subr.mxu0 %v433
    %636 = vmatpush1.msra.mxu0 %v432
    %637 = vmatprep.subr.mxu0 %v437
    %638 = vmatpush1.msra.mxu0 %v436
    %639 = vmatprep.subr.mxu0 %v441
    %640 = vmatpush1.msra.mxu0 %v440
    %641 = vmatprep.subr.mxu0 %v445
    %642 = vmatpush1.msra.mxu0 %v444
    %643 = vmatprep.subr.mxu0 %v449
    %644 = vmatpush1.msra.mxu0 %v448
    %645 = vmatprep.subr.mxu0 %v453
    %646 = vmatpush1.msra.mxu0 %v452
    %647 = vmatprep.subr.mxu0 %v457
    %648 = vmatpush1.msra.mxu0 %v456
    %649 = vmatprep.subr.mxu0 %v461
    %650 = vmatpush1.msra.mxu0 %v460
    %651 = vmatprep.subr.mxu0 %v465
    %652 = vmatpush1.msra.mxu0 %v464
    %653 = vmatprep.subr.mxu0 %v469
    %654 = vmatpush1.msra.mxu0 %v468
    %655 = vmatprep.subr.mxu0 %v473
    %656 = vmatpush1.msra.mxu0 %v472
    %657 = vmatprep.subr.mxu0 %v477
    %658 = vmatpush1.msra.mxu0 %v476
    %659 = vmatprep.subr.mxu0 %v481
    %660 = vmatpush1.msra.mxu0 %v480
    %661 = vmatprep.subr.mxu0 %v485
    %662 = vmatpush1.msra.mxu0 %v484
    %663 = vmatprep.subr.mxu0 %v489
    %664 = vmatpush1.msra.mxu0 %v488
    %665 = vmatprep.subr.mxu0 %v493
    %666 = vmatpush1.msra.mxu0 %v492
    %667 = vmatprep.subr.mxu0 %v497
    %668 = vmatpush1.msra.mxu0 %v496
    %669 = vmatprep.subr.mxu0 %v501
    %670 = vmatpush1.msra.mxu0 %v500
    %671 = vmatprep.subr.mxu0 %v505
    %672 = vmatpush1.msra.mxu0 %v504
    %673 = vmatprep.subr.mxu0 %v509
    %674 = vmatpush1.msra.mxu0 %v508
    %675 = vmatprep.subr.mxu0 %v513
    %676 = vmatpush1.msra.mxu0 %v512
    %677 = vmatprep.subr.mxu0 %v517
    %678 = vmatpush1.msra.mxu0 %v516
    %679 = vmatprep.subr.mxu0 %v521
    %680 = vmatpush1.msra.mxu0 %v520
    %681 = vmatprep.mubr.f32.mxu0 %v267
    %682 = vmatmul.mubr.f32.gmra.mrb[0].mxu0 %v266
    %v683 = vpop.f32.mrb[0].mxu0
    %v684 = vadd.f32 %v613, %v683
    %v685 = vpop.f32.mrb[0].mxu0
    %v686 = vadd.f32 %v615, %v685
    %687 = vdwg.mxu0
    %688 = vmatprep.subr.mxu0 %v271
    %689 = vmatpush1.msra.mxu0 %v270
    %690 = vmatprep.subr.mxu0 %v275
    %691 = vmatpush1.msra.mxu0 %v274
    %692 = vmatprep.subr.mxu0 %v279
    %693 = vmatpush1.msra.mxu0 %v278
    %694 = vmatprep.subr.mxu0 %v283
    %695 = vmatpush1.msra.mxu0 %v282
    %696 = vmatprep.subr.mxu0 %v287
    %697 = vmatpush1.msra.mxu0 %v286
    %698 = vmatprep.subr.mxu0 %v291
    %699 = vmatpush1.msra.mxu0 %v290
    %700 = vmatprep.subr.mxu0 %v295
    %701 = vmatpush1.msra.mxu0 %v294
    %702 = vmatprep.subr.mxu0 %v299
    %703 = vmatpush1.msra.mxu0 %v298
    %704 = vmatprep.subr.mxu0 %v303
    %705 = vmatpush1.msra.mxu0 %v302
    %706 = vmatprep.subr.mxu0 %v307
    %707 = vmatpush1.msra.mxu0 %v306
    %708 = vmatprep.subr.mxu0 %v311
    %709 = vmatpush1.msra.mxu0 %v310
    %710 = vmatprep.subr.mxu0 %v315
    %711 = vmatpush1.msra.mxu0 %v314
    %712 = vmatprep.subr.mxu0 %v319
    %713 = vmatpush1.msra.mxu0 %v318
    %714 = vmatprep.subr.mxu0 %v323
    %715 = vmatpush1.msra.mxu0 %v322
    %716 = vmatprep.subr.mxu0 %v327
    %717 = vmatpush1.msra.mxu0 %v326
    %718 = vmatprep.subr.mxu0 %v331
    %719 = vmatpush1.msra.mxu0 %v330
    %720 = vmatprep.subr.mxu0 %v335
    %721 = vmatpush1.msra.mxu0 %v334
    %722 = vmatprep.subr.mxu0 %v339
    %723 = vmatpush1.msra.mxu0 %v338
    %724 = vmatprep.subr.mxu0 %v343
    %725 = vmatpush1.msra.mxu0 %v342
    %726 = vmatprep.subr.mxu0 %v347
    %727 = vmatpush1.msra.mxu0 %v346
    %728 = vmatprep.subr.mxu0 %v351
    %729 = vmatpush1.msra.mxu0 %v350
    %730 = vmatprep.subr.mxu0 %v355
    %731 = vmatpush1.msra.mxu0 %v354
    %732 = vmatprep.subr.mxu0 %v359
    %733 = vmatpush1.msra.mxu0 %v358
    %734 = vmatprep.subr.mxu0 %v363
    %735 = vmatpush1.msra.mxu0 %v362
    %736 = vmatprep.subr.mxu0 %v367
    %737 = vmatpush1.msra.mxu0 %v366
    %738 = vmatprep.subr.mxu0 %v371
    %739 = vmatpush1.msra.mxu0 %v370
    %740 = vmatprep.subr.mxu0 %v375
    %741 = vmatpush1.msra.mxu0 %v374
    %742 = vmatprep.subr.mxu0 %v379
    %743 = vmatpush1.msra.mxu0 %v378
    %744 = vmatprep.subr.mxu0 %v383
    %745 = vmatpush1.msra.mxu0 %v382
    %746 = vmatprep.subr.mxu0 %v387
    %747 = vmatpush1.msra.mxu0 %v386
    %748 = vmatprep.subr.mxu0 %v391
    %749 = vmatpush1.msra.mxu0 %v390
    %750 = vmatprep.subr.mxu0 %v395
    %751 = vmatpush1.msra.mxu0 %v394
    %752 = vmatprep.mubr.f32.mxu0 %v265
    %753 = vmatmul.mubr.f32.gmra.mrb[0].mxu0 %v264
    %v754 = vpop.f32.mrb[0].mxu0
    %v755 = vadd.f32 %v537, %v754
    %v756 = vpop.f32.mrb[0].mxu0
    %v757 = vadd.f32 %v541, %v756
    %758 = vdwg.mxu0
    %759 = vmatprep.subr.mxu0 %v399
    %760 = vmatpush1.msra.mxu0 %v398
    %761 = vmatprep.subr.mxu0 %v403
    %762 = vmatpush1.msra.mxu0 %v402
    %763 = vmatprep.subr.mxu0 %v407
    %764 = vmatpush1.msra.mxu0 %v406
    %765 = vmatprep.subr.mxu0 %v411
    %766 = vmatpush1.msra.mxu0 %v410
    %767 = vmatprep.subr.mxu0 %v415
    %768 = vmatpush1.msra.mxu0 %v414
    %769 = vmatprep.subr.mxu0 %v419
    %770 = vmatpush1.msra.mxu0 %v418
    %771 = vmatprep.subr.mxu0 %v423
    %772 = vmatpush1.msra.mxu0 %v422
    %773 = vmatprep.subr.mxu0 %v427
    %774 = vmatpush1.msra.mxu0 %v426
    %775 = vmatprep.subr.mxu0 %v431
    %776 = vmatpush1.msra.mxu0 %v430
    %777 = vmatprep.subr.mxu0 %v435
    %778 = vmatpush1.msra.mxu0 %v434
    %779 = vmatprep.subr.mxu0 %v439
    %780 = vmatpush1.msra.mxu0 %v438
    %781 = vmatprep.subr.mxu0 %v443
    %782 = vmatpush1.msra.mxu0 %v442
    %783 = vmatprep.subr.mxu0 %v447
    %784 = vmatpush1.msra.mxu0 %v446
    %785 = vmatprep.subr.mxu0 %v451
    %786 = vmatpush1.msra.mxu0 %v450
    %787 = vmatprep.subr.mxu0 %v455
    %788 = vmatpush1.msra.mxu0 %v454
    %789 = vmatprep.subr.mxu0 %v459
    %790 = vmatpush1.msra.mxu0 %v458
    %791 = vmatprep.subr.mxu0 %v463
    %792 = vmatpush1.msra.mxu0 %v462
    %793 = vmatprep.subr.mxu0 %v467
    %794 = vmatpush1.msra.mxu0 %v466
    %795 = vmatprep.subr.mxu0 %v471
    %796 = vmatpush1.msra.mxu0 %v470
    %797 = vmatprep.subr.mxu0 %v475
    %798 = vmatpush1.msra.mxu0 %v474
    %799 = vmatprep.subr.mxu0 %v479
    %800 = vmatpush1.msra.mxu0 %v478
    %801 = vmatprep.subr.mxu0 %v483
    %802 = vmatpush1.msra.mxu0 %v482
    %803 = vmatprep.subr.mxu0 %v487
    %804 = vmatpush1.msra.mxu0 %v486
    %805 = vmatprep.subr.mxu0 %v491
    %806 = vmatpush1.msra.mxu0 %v490
    %807 = vmatprep.subr.mxu0 %v495
    %808 = vmatpush1.msra.mxu0 %v494
    %809 = vmatprep.subr.mxu0 %v499
    %810 = vmatpush1.msra.mxu0 %v498
    %811 = vmatprep.subr.mxu0 %v503
    %812 = vmatpush1.msra.mxu0 %v502
    %813 = vmatprep.subr.mxu0 %v507
    %814 = vmatpush1.msra.mxu0 %v506
    %815 = vmatprep.subr.mxu0 %v511
    %816 = vmatpush1.msra.mxu0 %v510
    %817 = vmatprep.subr.mxu0 %v515
    %818 = vmatpush1.msra.mxu0 %v514
    %819 = vmatprep.subr.mxu0 %v519
    %820 = vmatpush1.msra.mxu0 %v518
    %821 = vmatprep.subr.mxu0 %v523
    %822 = vmatpush1.msra.mxu0 %v522
    %823 = vmatprep.mubr.f32.mxu0 %v267
    %824 = vmatmul.mubr.f32.gmra.mrb[0].mxu0 %v266
    %v825 = vpop.f32.mrb[0].mxu0
    %v826 = vadd.f32 %v755, %v825
    %v827 = vpop.f32.mrb[0].mxu0
    %v828 = vadd.f32 %v757, %v827
    %829 = vdwg.mxu0
    %v830 = vmax.f32 %v684, 0.0
    %v831 = vmax.f32 %v686, 0.0
    %v832 = vmax.f32 %v826, 0.0
    %v833 = vmax.f32 %v828, 0.0
    %v834 = vld [vmem:[#allocation7] sm:$0xff]
    %v835 = vld [vmem:[#allocation7 + $0x8] sm:$0xff]
    %v836 = vld [vmem:[#allocation7 + $0x10] sm:$0xff]
    %v837 = vld [vmem:[#allocation7 + $0x18] sm:$0xff]
    %v838 = vld [vmem:[#allocation7 + $0x20] sm:$0xff]
    %v839 = vld [vmem:[#allocation7 + $0x28] sm:$0xff]
    %v840 = vld [vmem:[#allocation7 + $0x30] sm:$0xff]
    %v841 = vld [vmem:[#allocation7 + $0x38] sm:$0xff]
    %v842 = vld [vmem:[#allocation7 + $0x40] sm:$0xff]
    %v843 = vld [vmem:[#allocation7 + $0x48] sm:$0xff]
    %v844 = vld [vmem:[#allocation7 + $0x50] sm:$0xff]
    %v845 = vld [vmem:[#allocation7 + $0x58] sm:$0xff]
    %v846 = vld [vmem:[#allocation7 + $0x60] sm:$0xff]
    %v847 = vld [vmem:[#allocation7 + $0x68] sm:$0xff]
    %v848 = vld [vmem:[#allocation7 + $0x70] sm:$0xff]
    %v849 = vld [vmem:[#allocation7 + $0x78] sm:$0xff]
    %v850 = vld [vmem:[#allocation7 + $0x80] sm:$0xff]
    %v851 = vld [vmem:[#allocation7 + $0x88] sm:$0xff]
    %v852 = vld [vmem:[#allocation7 + $0x90] sm:$0xff]
    %v853 = vld [vmem:[#allocation7 + $0x98] sm:$0xff]
    %v854 = vld [vmem:[#allocation7 + $0xa0] sm:$0xff]
    %v855 = vld [vmem:[#allocation7 + $0xa8] sm:$0xff]
    %v856 = vld [vmem:[#allocation7 + $0xb0] sm:$0xff]
    %v857 = vld [vmem:[#allocation7 + $0xb8] sm:$0xff]
    %v858 = vld [vmem:[#allocation7 + $0xc0] sm:$0xff]
    %v859 = vld [vmem:[#allocation7 + $0xc8] sm:$0xff]
    %v860 = vld [vmem:[#allocation7 + $0xd0] sm:$0xff]
    %v861 = vld [vmem:[#allocation7 + $0xd8] sm:$0xff]
    %v862 = vld [vmem:[#allocation7 + $0xe0] sm:$0xff]
    %v863 = vld [vmem:[#allocation7 + $0xe8] sm:$0xff]
    %v864 = vld [vmem:[#allocation7 + $0xf0] sm:$0xff]
    %v865 = vld [vmem:[#allocation7 + $0xf8] sm:$0xff]
    %v866 = vld [vmem:[#allocation7 + $0x100] sm:$0xff]
    %v867 = vld [vmem:[#allocation7 + $0x108] sm:$0xff]
    %v868 = vld [vmem:[#allocation7 + $0x110] sm:$0xff]
    %v869 = vld [vmem:[#allocation7 + $0x118] sm:$0xff]
    %v870 = vld [vmem:[#allocation7 + $0x120] sm:$0xff]
    %v871 = vld [vmem:[#allocation7 + $0x128] sm:$0xff]
    %v872 = vld [vmem:[#allocation7 + $0x130] sm:$0xff]
    %v873 = vld [vmem:[#allocation7 + $0x138] sm:$0xff]
    %v874 = vld [vmem:[#allocation7 + $0x140] sm:$0xff]
    %v875 = vld [vmem:[#allocation7 + $0x148] sm:$0xff]
    %v876 = vld [vmem:[#allocation7 + $0x150] sm:$0xff]
    %v877 = vld [vmem:[#allocation7 + $0x158] sm:$0xff]
    %v878 = vld [vmem:[#allocation7 + $0x160] sm:$0xff]
    %v879 = vld [vmem:[#allocation7 + $0x168] sm:$0xff]
    %v880 = vld [vmem:[#allocation7 + $0x170] sm:$0xff]
    %v881 = vld [vmem:[#allocation7 + $0x178] sm:$0xff]
    %v882 = vld [vmem:[#allocation7 + $0x180] sm:$0xff]
    %v883 = vld [vmem:[#allocation7 + $0x188] sm:$0xff]
    %v884 = vld [vmem:[#allocation7 + $0x190] sm:$0xff]
    %v885 = vld [vmem:[#allocation7 + $0x198] sm:$0xff]
    %v886 = vld [vmem:[#allocation7 + $0x1a0] sm:$0xff]
    %v887 = vld [vmem:[#allocation7 + $0x1a8] sm:$0xff]
    %v888 = vld [vmem:[#allocation7 + $0x1b0] sm:$0xff]
    %v889 = vld [vmem:[#allocation7 + $0x1b8] sm:$0xff]
    %v890 = vld [vmem:[#allocation7 + $0x1c0] sm:$0xff]
    %v891 = vld [vmem:[#allocation7 + $0x1c8] sm:$0xff]
    %v892 = vld [vmem:[#allocation7 + $0x1d0] sm:$0xff]
    %v893 = vld [vmem:[#allocation7 + $0x1d8] sm:$0xff]
    %v894 = vld [vmem:[#allocation7 + $0x1e0] sm:$0xff]
    %v895 = vld [vmem:[#allocation7 + $0x1e8] sm:$0xff]
    %v896 = vld [vmem:[#allocation7 + $0x1f0] sm:$0xff]
    %v897 = vld [vmem:[#allocation7 + $0x1f8] sm:$0xff]
    %v898 = vld [vmem:[%s6] sm:$0x1]
    %v900 = vlaneseq
    %v901 = vshrl.u32 %v900, 7
    %v902 = vsub.s32 0, %v901
    %v903 = vrot.slane %v898, %v902
    %905 = vmatprep.subr.mxu0 0.0
    %906 = vmatpush1.msra.mxu0 %v834
    %907 = vmatprep.subr.mxu0 0.0
    %908 = vmatpush1.msra.mxu0 %v835
    %909 = vmatprep.subr.mxu0 0.0
    %910 = vmatpush1.msra.mxu0 %v836
    %911 = vmatprep.subr.mxu0 0.0
    %912 = vmatpush1.msra.mxu0 %v837
    %913 = vmatprep.subr.mxu0 0.0
    %914 = vmatpush1.msra.mxu0 %v838
    %915 = vmatprep.subr.mxu0 0.0
    %916 = vmatpush1.msra.mxu0 %v839
    %917 = vmatprep.subr.mxu0 0.0
    %918 = vmatpush1.msra.mxu0 %v840
    %919 = vmatprep.subr.mxu0 0.0
    %920 = vmatpush1.msra.mxu0 %v841
    %921 = vmatprep.subr.mxu0 0.0
    %922 = vmatpush1.msra.mxu0 %v842
    %923 = vmatprep.subr.mxu0 0.0
    %924 = vmatpush1.msra.mxu0 %v843
    %925 = vmatprep.subr.mxu0 0.0
    %926 = vmatpush1.msra.mxu0 %v844
    %927 = vmatprep.subr.mxu0 0.0
    %928 = vmatpush1.msra.mxu0 %v845
    %929 = vmatprep.subr.mxu0 0.0
    %930 = vmatpush1.msra.mxu0 %v846
    %931 = vmatprep.subr.mxu0 0.0
    %932 = vmatpush1.msra.mxu0 %v847
    %933 = vmatprep.subr.mxu0 0.0
    %934 = vmatpush1.msra.mxu0 %v848
    %935 = vmatprep.subr.mxu0 0.0
    %936 = vmatpush1.msra.mxu0 %v849
    %937 = vmatprep.subr.mxu0 0.0
    %938 = vmatpush1.msra.mxu0 %v850
    %939 = vmatprep.subr.mxu0 0.0
    %940 = vmatpush1.msra.mxu0 %v851
    %941 = vmatprep.subr.mxu0 0.0
    %942 = vmatpush1.msra.mxu0 %v852
    %943 = vmatprep.subr.mxu0 0.0
    %944 = vmatpush1.msra.mxu0 %v853
    %945 = vmatprep.subr.mxu0 0.0
    %946 = vmatpush1.msra.mxu0 %v854
    %947 = vmatprep.subr.mxu0 0.0
    %948 = vmatpush1.msra.mxu0 %v855
    %949 = vmatprep.subr.mxu0 0.0
    %950 = vmatpush1.msra.mxu0 %v856
    %951 = vmatprep.subr.mxu0 0.0
    %952 = vmatpush1.msra.mxu0 %v857
    %953 = vmatprep.subr.mxu0 0.0
    %954 = vmatpush1.msra.mxu0 %v858
    %955 = vmatprep.subr.mxu0 0.0
    %956 = vmatpush1.msra.mxu0 %v859
    %957 = vmatprep.subr.mxu0 0.0
    %958 = vmatpush1.msra.mxu0 %v860
    %959 = vmatprep.subr.mxu0 0.0
    %960 = vmatpush1.msra.mxu0 %v861
    %961 = vmatprep.subr.mxu0 0.0
    %962 = vmatpush1.msra.mxu0 %v862
    %963 = vmatprep.subr.mxu0 0.0
    %964 = vmatpush1.msra.mxu0 %v863
    %965 = vmatprep.subr.mxu0 0.0
    %966 = vmatpush1.msra.mxu0 %v864
    %967 = vmatprep.subr.mxu0 0.0
    %968 = vmatpush1.msra.mxu0 %v865
    %969 = vmatprep.mubr.f32.mxu0 %v831
    %970 = vmatmul.mubr.f32.gmra.mrb[0].mxu0 %v830
    %v971 = vpop.f32.mrb[0].mxu0
    %v972 = vadd.f32 %v903, %v971
    %v973 = vpop.f32.mrb[0].mxu0
    %974 = vdwg.mxu0
    %975 = vmatprep.subr.mxu0 0.0
    %976 = vmatpush1.msra.mxu0 %v866
    %977 = vmatprep.subr.mxu0 0.0
    %978 = vmatpush1.msra.mxu0 %v867
    %979 = vmatprep.subr.mxu0 0.0
    %980 = vmatpush1.msra.mxu0 %v868
    %981 = vmatprep.subr.mxu0 0.0
    %982 = vmatpush1.msra.mxu0 %v869
    %983 = vmatprep.subr.mxu0 0.0
    %984 = vmatpush1.msra.mxu0 %v870
    %985 = vmatprep.subr.mxu0 0.0
    %986 = vmatpush1.msra.mxu0 %v871
    %987 = vmatprep.subr.mxu0 0.0
    %988 = vmatpush1.msra.mxu0 %v872
    %989 = vmatprep.subr.mxu0 0.0
    %990 = vmatpush1.msra.mxu0 %v873
    %991 = vmatprep.subr.mxu0 0.0
    %992 = vmatpush1.msra.mxu0 %v874
    %993 = vmatprep.subr.mxu0 0.0
    %994 = vmatpush1.msra.mxu0 %v875
    %995 = vmatprep.subr.mxu0 0.0
    %996 = vmatpush1.msra.mxu0 %v876
    %997 = vmatprep.subr.mxu0 0.0
    %998 = vmatpush1.msra.mxu0 %v877
    %999 = vmatprep.subr.mxu0 0.0
    %1000 = vmatpush1.msra.mxu0 %v878
    %1001 = vmatprep.subr.mxu0 0.0
    %1002 = vmatpush1.msra.mxu0 %v879
    %1003 = vmatprep.subr.mxu0 0.0
    %1004 = vmatpush1.msra.mxu0 %v880
    %1005 = vmatprep.subr.mxu0 0.0
    %1006 = vmatpush1.msra.mxu0 %v881
    %1007 = vmatprep.subr.mxu0 0.0
    %1008 = vmatpush1.msra.mxu0 %v882
    %1009 = vmatprep.subr.mxu0 0.0
    %1010 = vmatpush1.msra.mxu0 %v883
    %1011 = vmatprep.subr.mxu0 0.0
    %1012 = vmatpush1.msra.mxu0 %v884
    %1013 = vmatprep.subr.mxu0 0.0
    %1014 = vmatpush1.msra.mxu0 %v885
    %1015 = vmatprep.subr.mxu0 0.0
    %1016 = vmatpush1.msra.mxu0 %v886
    %1017 = vmatprep.subr.mxu0 0.0
    %1018 = vmatpush1.msra.mxu0 %v887
    %1019 = vmatprep.subr.mxu0 0.0
    %1020 = vmatpush1.msra.mxu0 %v888
    %1021 = vmatprep.subr.mxu0 0.0
    %1022 = vmatpush1.msra.mxu0 %v889
    %1023 = vmatprep.subr.mxu0 0.0
    %1024 = vmatpush1.msra.mxu0 %v890
    %1025 = vmatprep.subr.mxu0 0.0
    %1026 = vmatpush1.msra.mxu0 %v891
    %1027 = vmatprep.subr.mxu0 0.0
    %1028 = vmatpush1.msra.mxu0 %v892
    %1029 = vmatprep.subr.mxu0 0.0
    %1030 = vmatpush1.msra.mxu0 %v893
    %1031 = vmatprep.subr.mxu0 0.0
    %1032 = vmatpush1.msra.mxu0 %v894
    %1033 = vmatprep.subr.mxu0 0.0
    %1034 = vmatpush1.msra.mxu0 %v895
    %1035 = vmatprep.subr.mxu0 0.0
    %1036 = vmatpush1.msra.mxu0 %v896
    %1037 = vmatprep.subr.mxu0 0.0
    %1038 = vmatpush1.msra.mxu0 %v897
    %1039 = vmatprep.mubr.f32.mxu0 %v833
    %1040 = vmatmul.mubr.f32.gmra.mrb[0].mxu0 %v832
    %v1041 = vpop.f32.mrb[0].mxu0
    %v1042 = vadd.f32 %v972, %v1041
    %v1043 = vpop.f32.mrb[0].mxu0
    %1044 = vdwg.mxu0
    %1045 = vst [vmem:[%s7] sm:$0xff] %v1042
    // Predicated region
    $region46: #{dueling_forward.1} parent=1 // pred_check
      _
    $region47: #{dueling_forward.1} parent=1 // pred_check_branch
      %1047 = sbr.rel (0) target = $region49
    $region48: #{dueling_forward.1} parent=1 // pred_region
      _
    $region49: #{dueling_forward.1} parent=1 // pred_fallthru
      _
    // Predicated region
    $region50: #{dueling_forward.1} parent=1 // pred_check
      _
    $region51: #{dueling_forward.1} parent=1 // pred_check_branch
      %1049 = sbr.rel (0) target = $region53
    $region52: #{dueling_forward.1} parent=1 // pred_region
      _
    $region53: #{dueling_forward.1} parent=1 // pred_fallthru
      _
    %1050 = vsyncpa [#allocation3], 1
    %1051 = vsyncpa [#allocation5], 1
    %1052 = vsyncpa [#allocation8], 1

</llo_original>
